<compile_context>
chip_gen: v7x
topology: tpu7x:2x2x1
jax: 0.10.0
libtpu: 0.0.40
codegen_flags: <defaults>
</compile_context>

<pallas_src>
import functools

import jax
import jax.numpy as jnp
from jax import lax
from jax.experimental import pallas as pl
from jax.experimental.pallas import tpu as pltpu


def _round_up(a, b):
    return ((a + b - 1) // b) * b


def _pick_tile(Np, B, max_tile):
    """Largest tile in {max_tile,512,256,128} dividing Np, shrunk (if possible)
    so the grid has >= 2 points for v7x's two TensorCores."""
    max_tile = max(int(max_tile), 128)
    candidates = [t for t in (1024, 512, 256, 128) if t <= max_tile and Np % t == 0]
    if not candidates:
        candidates = [128]  # Np is always a multiple of 128
    T = candidates[-1]
    for t in candidates:  # descending order
        T = t
        if B * (Np // t) ** 2 >= 2:
            break
    return T


def _contact_map_kernel(lhs_ref, rhs_ref, d_ref, *, tile):
    # lhs_ref: (K, Np)  resident augmented slab, rows [x ; ||x||^2 ; 1 ; 0-pad]
    # rhs_ref: (K, Np)  resident augmented slab, rows [-2x ; 1 ; ||x||^2 ; 0-pad]
    # d_ref:   (T, T)   lane-dense output tile
    i0 = pl.multiple_of(pl.program_id(1) * tile, tile)
    j0 = pl.multiple_of(pl.program_id(2) * tile, tile)

    a = lhs_ref[:, pl.ds(i0, tile)]          # (K, T)
    b = rhs_ref[:, pl.ds(j0, tile)]          # (K, T)

    # Single augmented MXU contraction over the leading K dim:
    #   D[i, j] = ||xi||^2 + ||xj||^2 - 2 xi.xj   (f32 accumulation)
    d = lax.dot_general(
        a, b,
        dimension_numbers=(((0,), (0,)), ((), ())),
        preferred_element_type=jnp.float32)   # (T, T) f32

    d_ref[...] = jnp.maximum(d, 0.0).astype(d_ref.dtype)


def contact_map(x, *, out_dtype=None, max_tile=1024):
    """X: (B, C, N) -> D: (B, N, N), D[b,i,j] = relu(||xi||^2 + ||xj||^2 - 2 xi.xj).

    out_dtype: output element type (default x.dtype). Pass jnp.bfloat16 to
    halve HBM writeback; accumulation stays f32 inside the kernel.
    """
    B, C, N = x.shape
    out_dtype = x.dtype if out_dtype is None else out_dtype

    # Pad N only to the 128-lane granule (NOT up to a multiple of T).
    Np = _round_up(N, 128)
    T = _pick_tile(Np, B, max_tile)

    xf = x.astype(jnp.float32)
    if Np != N:
        xf = jnp.pad(xf, ((0, 0), (0, 0), (0, Np - N)))

    # Augmented slabs (K = C + 2, zero-padded up to a sublane multiple of 8).
    K = _round_up(C + 2, 8)
    norms = jnp.sum(xf * xf, axis=1, keepdims=True)        # (B, 1, Np)
    ones = jnp.ones((B, 1, Np), jnp.float32)
    pad_rows = K - (C + 2)
    zpad = [jnp.zeros((B, pad_rows, Np), jnp.float32)] if pad_rows > 0 else []
    lhs = jnp.concatenate([xf, norms, ones] + zpad, axis=1)          # (B, K, Np)
    rhs = jnp.concatenate([-2.0 * xf, ones, norms] + zpad, axis=1)   # (B, K, Np)

    # Explicit VMEM budget: 2x output tile (double buffer) + 2 inputs x 2 bufs
    # of the resident (K, Np) slab, with headroom. Keeps T=1024/f32 within
    # v7x's 64 MiB physical VMEM; trivial on v5e/v6e.
    out_tile_bytes = 2 * T * T * jnp.dtype(out_dtype).itemsize
    slab_bytes = 2 * 2 * K * Np * 4
    vmem_limit = min(48 * 1024 * 1024,
                     max(32 * 1024 * 1024, int(1.5 * (out_tile_bytes + slab_bytes))))

    kernel = functools.partial(_contact_map_kernel, tile=T)

    d = pl.pallas_call(
        kernel,
        out_shape=jax.ShapeDtypeStruct((B, Np, Np), out_dtype),
        grid_spec=pltpu.PrefetchScalarGridSpec(
            num_scalar_prefetch=0,
            grid=(B, Np // T, Np // T),
            in_specs=[
                # Whole (K, Np) slabs resident; only re-DMA'd when b changes.
                pl.BlockSpec((pl.Squeezed(), K, Np), lambda b, i, j: (b, 0, 0)),
                pl.BlockSpec((pl.Squeezed(), K, Np), lambda b, i, j: (b, 0, 0)),
            ],
            out_specs=pl.BlockSpec((pl.Squeezed(), T, T),
                                   lambda b, i, j: (b, i, j)),
        ),
        compiler_params=pltpu.CompilerParams(
            # Every grid point writes an independent output tile -> all parallel
            # (lets v7x megacore split the tile axes even when B is tiny).
            dimension_semantics=("parallel", "parallel", "parallel"),
            vmem_limit_bytes=vmem_limit,
        ),
    )(lhs, rhs)

    if Np != N:
        d = d[:, :N, :N]
    return d


def contact_map_ref(x):
    xsq = jnp.sum(x * x, axis=1, keepdims=True)                # (B, 1, N)
    xx = xsq + jnp.swapaxes(xsq, 1, 2)                         # (B, N, N)
    xtx = jnp.einsum("bcn,bcm->bnm", x, x)                     # (B, N, N)
    return jnp.maximum(xx - 2.0 * xtx, 0.0)


if __name__ == "__main__":
    key = jax.random.PRNGKey(0)

    # Primary small case: 3-D coordinates (the module's adjoint assumes C=3).
    B, C, N = 2, 3, 16
    x = jax.random.normal(key, (B, C, N), dtype=jnp.float32)
    d = jax.block_until_ready(contact_map(x))
    assert d.shape == (B, N, N)
    assert jnp.allclose(d, contact_map_ref(x), atol=1e-5, rtol=1e-5)

    # Ragged-N case exercising the fixed padding policy (Np=256, tile shrink).
    x2 = jax.random.normal(jax.random.PRNGKey(1), (1, 3, 200), dtype=jnp.float32)
    d2 = jax.block_until_ready(contact_map(x2))
    assert d2.shape == (1, 200, 200)
    assert jnp.allclose(d2, contact_map_ref(x2), atol=1e-5, rtol=1e-5)

    print("KERNEL_OK")
</pallas_src>

<mosaic_0001>
module attributes {stable_mosaic.version = 11 : i64} {
  func.func @_contact_map_kernel(%arg0: i32, %arg1: i32, %arg2: i32, %arg3: memref<1x8x128xf32, #tpu.memory_space<vmem>>, %arg4: memref<1x8x128xf32, #tpu.memory_space<vmem>>, %arg5: memref<1x128x128xf32, #tpu.memory_space<vmem>>) attributes {dimension_semantics = [#tpu.dimension_semantics<parallel>, #tpu.dimension_semantics<parallel>, #tpu.dimension_semantics<parallel>], iteration_bounds = array<i64: 2, 1, 1>, scalar_prefetch = 0 : i64, scratch_operands = 0 : i64, tpu.core_type = #tpu.core_type<tc>, window_params = [{transform_indices = @transform_0, window_bounds = array<i64: 1, 8, 128>}, {transform_indices = @transform_1, window_bounds = array<i64: 1, 8, 128>}, {transform_indices = @transform_2, window_bounds = array<i64: 1, 128, 128>}]} {
    %c128_i32 = arith.constant 128 : i32
    %0 = arith.muli %arg1, %c128_i32 : i32
    %1 = tpu.assume_multiple %0, 128 : i32
    %c128_i32_0 = arith.constant 128 : i32
    %2 = arith.muli %arg2, %c128_i32_0 : i32
    %3 = tpu.assume_multiple %2, 128 : i32
    %c0 = arith.constant 0 : index
    %c0_1 = arith.constant 0 : index
    %4 = arith.index_cast %1 : i32 to index
    %5 = vector.load %arg3[%c0, %c0_1, %4] : memref<1x8x128xf32, #tpu.memory_space<vmem>>, vector<1x8x128xf32>
    %6 = vector.shape_cast %5 : vector<1x8x128xf32> to vector<8x128xf32>
    %c0_2 = arith.constant 0 : index
    %c0_3 = arith.constant 0 : index
    %7 = arith.index_cast %3 : i32 to index
    %8 = vector.load %arg4[%c0_2, %c0_3, %7] : memref<1x8x128xf32, #tpu.memory_space<vmem>>, vector<1x8x128xf32>
    %9 = vector.shape_cast %8 : vector<1x8x128xf32> to vector<8x128xf32>
    %cst = arith.constant dense<0.000000e+00> : vector<128x128xf32>
    %10 = tpu.matmul %6, %9, %cst {dimension_numbers = #tpu.dot_dimension_numbers<[0], [0], [1], [1], [0, 1, 1, 1], [], []>} : vector<8x128xf32>, vector<8x128xf32>, vector<128x128xf32> -> vector<128x128xf32>
    %cst_4 = arith.constant 0.000000e+00 : f32
    %11 = vector.broadcast %cst_4 : f32 to vector<128x128xf32>
    %12 = arith.maximumf %10, %11 : vector<128x128xf32>
    %c0_5 = arith.constant 0 : index
    %c0_6 = arith.constant 0 : index
    %c0_7 = arith.constant 0 : index
    %13 = vector.load %arg5[%c0_5, %c0_6, %c0_7] : memref<1x128x128xf32, #tpu.memory_space<vmem>>, vector<1x128x128xf32>
    %14 = vector.shape_cast %13 : vector<1x128x128xf32> to vector<128x128xf32>
    %15 = vector.shape_cast %12 : vector<128x128xf32> to vector<1x128x128xf32>
    tpu.vector_store %arg5[%c0_5, %c0_6, %c0_7], %15 {strides = array<i32>} : memref<1x128x128xf32, #tpu.memory_space<vmem>>, vector<1x128x128xf32>,
    return
  }
  func.func @transform_0(%arg0: i32, %arg1: i32, %arg2: i32) -> (i32, i32, i32) {
    %c0_i32 = arith.constant 0 : i32
    %c0_i32_0 = arith.constant 0 : i32
    %c0_i32_1 = arith.constant 0 : i32
    return %arg0, %c0_i32, %c0_i32_0 : i32, i32, i32
  }
  func.func @transform_1(%arg0: i32, %arg1: i32, %arg2: i32) -> (i32, i32, i32) {
    %c0_i32 = arith.constant 0 : i32
    %c0_i32_0 = arith.constant 0 : i32
    %c0_i32_1 = arith.constant 0 : i32
    return %arg0, %c0_i32, %c0_i32_0 : i32, i32, i32
  }
  func.func @transform_2(%arg0: i32, %arg1: i32, %arg2: i32) -> (i32, i32, i32) {
    %c0_i32 = arith.constant 0 : i32
    return %arg0, %arg1, %arg2 : i32, i32, i32
  }
}

</mosaic_0001>

<llo_original>
// kernel: tpu_custom_call.1
$region0: #{tpu_custom_call.1}
  #allocation0 [shape = 'u32[]', space=smem, size = 0x4, offset = 0x4, fixed_abs, tag = 'smem constant byte address 0x4 - core index']
  #allocation1 [shape = 'u32[144,128]{1,0:T(1,128)}', space=vmem, size = 0x12000, scoped, tag = 'internal scratch']
  %s0 = inlined_call_operand.hbm [shape: f32[2,8,128], index: 0, kind: input, shape index: {}]
  %s1 = inlined_call_operand.hbm [shape: f32[2,8,128], index: 1, kind: input, shape index: {}]
  %s2 = inlined_call_operand.hbm [shape: f32[2,128,128], index: 2, kind: output, shape index: {}]
  %s3 = sld [smem:[#allocation0]]
  $region49: #{tpu_custom_call.1} parent=0
    _
  %s5 = ssub.s32 1, %s3
  %s6 = scalar_select 0, %s5, %s3
  $region1: #{tpu_custom_call.1} parent=0
    #allocation2 [shape = 'u8[8192]{0}', space=vmem, size = 0x2000, scoped, tag = 'input window, operand 0']
    #allocation3 [shape = 's32[2]{0}', space=sflag, size = 0x8, scoped, tag = 'scoped memory for tpu_custom_call.1']
    #allocation4 [shape = 's32[2]{0}', space=sflag, size = 0x8, scoped, tag = 'scoped memory for tpu_custom_call.1']
    #allocation5 [shape = 'u8[8192]{0}', space=vmem, size = 0x2000, scoped, tag = 'input window, operand 1']
    #allocation6 [shape = 's32[2]{0}', space=sflag, size = 0x8, scoped, tag = 'scoped memory for tpu_custom_call.1']
    #allocation7 [shape = 'u8[131072]{0}', space=vmem, size = 0x20000, scoped, tag = 'output window, operand 0']
    %7 = vsyncpa [#allocation3], 0
    %s8 = scalar_lea.sflag [#allocation3], 1
    %9 = vsyncpa %s8, 0
    %10 = vsyncpa [#allocation6], 0
    %s11 = scalar_lea.sflag [#allocation6], 1
    %12 = vsyncpa %s11, 0
    %13 = vsyncpa [#allocation4], 0
    %s14 = scalar_lea.sflag [#allocation4], 1
    %15 = vsyncpa %s14, 0
    loop: start=0, step=1, limit=4
    $region2: #{tpu_custom_call.1} parent=1 // loop_pre_header
      _
    $region3: #{tpu_custom_call.1} parent=1 // loop_header
      %s17 = sphi 0, %s21
      %p18 = scmp.ge.s32.totalorder %s17, 4
      %s24 = sphi 0, %s43
      %s25 = sphi 0, %s39
      %s26 = sphi 0, %s35
      %s27 = sphi 0, %s24
      %s28 = sphi 0, %s25
      %s29 = sphi 0, %s26
      %s30 = sphi 0, %s27
      %s31 = sphi 0, %s28
      %s32 = sphi 0, %s29
      %s46 = sphi 0, %s48
      %s49 = sphi 0, %s46
      %s50 = sphi 0, %s49
      %s66 = sphi 0, %s50
      %s72 = sphi 0, %s74
      %s75 = sphi 0, %s72
      %s76 = sphi 0, %s75
      %s92 = sphi 0, %s76
      %s102 = sphi 0, %s104
      %s105 = sphi 0, %s102
      %s106 = sphi 0, %s105
      %s122 = sphi 0, %s106
    $region4: #{tpu_custom_call.1} parent=1 // loop_header_branch
      %20 = sbr.rel (%p18) target = $region8
    $region5: #{tpu_custom_call.1} parent=1 // loop_body
      %s22 = ssub.s32 %s17, 1
      %s23 = ssub.s32 %s17, 2
      %s33 = sadd.s32 1, %s26
      %p34 = scmp.ge.s32.totalorder %s33, 1
      %s35 = scalar_select %p34, 0, %s33
      %s36 = sadd.s32 1, %s25
      %s37 = scalar_select %p34, %s36, %s25
      %p38 = scmp.ge.s32.totalorder %s37, 1
      %s39 = scalar_select %p38, 0, %s37
      %s40 = sadd.s32 1, %s24
      %s41 = scalar_select %p38, %s40, %s24
      %p42 = scmp.ge.s32.totalorder %s41, 2
      %s43 = scalar_select %p42, 0, %s41
      %s44 = ssub.s32 %s24, %s43
      %p45 = scmp.eq.s32.totalorder %s44, 0
      %s47 = sadd.s32 %s46, 1
      %s48 = scalar_select %p45, %s46, %s47
      %p51 = pneg %p45
      %p52 = scmp.eq.s32.totalorder %s17, 1
      %p53 = por %p51, %p52
      %p54 = scmp.ne.s32.totalorder %s46, %s49
      %p55 = scmp.eq.s32.totalorder %s17, 0
      %p56 = por %p54, %p55
      %p57 = scmp.ne.s32.totalorder %s46, %s49
      %p58 = scmp.eq.s32.totalorder %s22, 1
      %p59 = por %p57, %p58
      %p60 = scmp.ne.s32.totalorder %s49, %s50
      %p61 = scmp.eq.s32.totalorder %s22, 0
      %p62 = por %p60, %p61
      %p63 = scmp.ne.s32.totalorder %s49, %s50
      %p64 = scmp.eq.s32.totalorder %s23, 1
      %p65 = por %p63, %p64
      %p67 = scmp.ne.s32.totalorder %s50, %s66
      %p68 = scmp.eq.s32.totalorder %s23, 0
      %p69 = por %p67, %p68
      %s70 = ssub.s32 %s24, %s43
      %p71 = scmp.eq.s32.totalorder %s70, 0
      %s73 = sadd.s32 %s72, 1
      %s74 = scalar_select %p71, %s72, %s73
      %p77 = pneg %p71
      %p78 = scmp.eq.s32.totalorder %s17, 1
      %p79 = por %p77, %p78
      %p80 = scmp.ne.s32.totalorder %s72, %s75
      %p81 = scmp.eq.s32.totalorder %s17, 0
      %p82 = por %p80, %p81
      %p83 = scmp.ne.s32.totalorder %s72, %s75
      %p84 = scmp.eq.s32.totalorder %s22, 1
      %p85 = por %p83, %p84
      %p86 = scmp.ne.s32.totalorder %s75, %s76
      %p87 = scmp.eq.s32.totalorder %s22, 0
      %p88 = por %p86, %p87
      %p89 = scmp.ne.s32.totalorder %s75, %s76
      %p90 = scmp.eq.s32.totalorder %s23, 1
      %p91 = por %p89, %p90
      %p93 = scmp.ne.s32.totalorder %s76, %s92
      %p94 = scmp.eq.s32.totalorder %s23, 0
      %p95 = por %p93, %p94
      %s96 = ssub.s32 %s24, %s43
      %s97 = ssub.s32 %s25, %s39
      %s98 = sor.u32 %s96, %s97
      %s99 = ssub.s32 %s26, %s35
      %s100 = sor.u32 %s98, %s99
      %p101 = scmp.eq.s32.totalorder %s100, 0
      %s103 = sadd.s32 %s102, 1
      %s104 = scalar_select %p101, %s102, %s103
      %p107 = pneg %p101
      %p108 = scmp.eq.s32.totalorder %s17, 1
      %p109 = por %p107, %p108
      %p110 = scmp.ne.s32.totalorder %s102, %s105
      %p111 = scmp.eq.s32.totalorder %s17, 0
      %p112 = por %p110, %p111
      %p113 = scmp.ne.s32.totalorder %s102, %s105
      %p114 = scmp.eq.s32.totalorder %s22, 1
      %p115 = por %p113, %p114
      %p116 = scmp.ne.s32.totalorder %s105, %s106
      %p117 = scmp.eq.s32.totalorder %s22, 0
      %p118 = por %p116, %p117
      %p119 = scmp.ne.s32.totalorder %s105, %s106
      %p120 = scmp.eq.s32.totalorder %s23, 1
      %p121 = por %p119, %p120
      %p123 = scmp.ne.s32.totalorder %s106, %s122
      %p124 = scmp.eq.s32.totalorder %s23, 0
      %p125 = por %p123, %p124
      %p126 = scmp.le.s32.totalorder 1, %s17
      %p127 = scmp.lt.s32.totalorder %s17, 3
      %p128 = pnand %p126, %p127
      %p129 = pneg %p128
      // Predicated region
      $region9: #{tpu_custom_call.1} parent=5 // pred_check
        _
      $region10: #{tpu_custom_call.1} parent=5 // pred_check_branch
        %131 = sbr.rel (%p128) target = $region12
      $region11: #{tpu_custom_call.1} parent=5 // pred_region
        %s132 = ssub.s32 %s17, 1
      $region12: #{tpu_custom_call.1} parent=5 // pred_fallthru
        _
      %p133 = scmp.lt.s32.totalorder %s17, 2
      // Predicated region
      $region13: #{tpu_custom_call.1} parent=5 // pred_check
        %p134 = pneg %p133
      $region14: #{tpu_custom_call.1} parent=5 // pred_check_branch
        %136 = sbr.rel (%p134) target = $region16
      $region15: #{tpu_custom_call.1} parent=5 // pred_region
        // Predicated region
        $region17: #{tpu_custom_call.1} parent=15 // pred_check
          %p137 = pneg %p56
        $region18: #{tpu_custom_call.1} parent=15 // pred_check_branch
          %139 = sbr.rel (%p137) target = $region20
        $region19: #{tpu_custom_call.1} parent=15 // pred_region
          %s140 = sand.u32 %s46, 1
          %s141 = scalar_lea.sflag [#allocation3], %s140
          %s142 = sand.u32 %s46, 1
          %s143 = smul.addr %s142, 8
          %s144 = scalar_lea.vmem [#allocation2], %s143
          %s146 = ssub.s32 128, 128
          %147 = vsyncadd %s141, %s146
          %s148 = smul.addr %s24, 128
          %s149 = scalar_lea.hbm %s0, %s148
          %s151 = sshll.u32 %s144, 4
          %s152 = int_to_ptr.vmem [resolvable:$true] %s151
          %154 = dma.hbm_to_vmem [thread:$0]  %s149, 128, %s152, %s141
        $region20: #{tpu_custom_call.1} parent=15 // pred_fallthru
          _
        // Predicated region
        $region21: #{tpu_custom_call.1} parent=15 // pred_check
          %p155 = pneg %p82
        $region22: #{tpu_custom_call.1} parent=15 // pred_check_branch
          %157 = sbr.rel (%p155) target = $region24
        $region23: #{tpu_custom_call.1} parent=15 // pred_region
          %s158 = sand.u32 %s72, 1
          %s159 = scalar_lea.sflag [#allocation6], %s158
          %s160 = sand.u32 %s72, 1
          %s161 = smul.addr %s160, 8
          %s162 = scalar_lea.vmem [#allocation5], %s161
          %s164 = ssub.s32 128, 128
          %165 = vsyncadd %s159, %s164
          %s166 = smul.addr %s24, 128
          %s167 = scalar_lea.hbm %s1, %s166
          %s169 = sshll.u32 %s162, 4
          %s170 = int_to_ptr.vmem [resolvable:$true] %s169
          %172 = dma.hbm_to_vmem [thread:$0]  %s167, 128, %s170, %s159
        $region24: #{tpu_custom_call.1} parent=15 // pred_fallthru
          _
      $region16: #{tpu_custom_call.1} parent=5 // pred_fallthru
        _
      %p173 = scmp.le.s32.totalorder 1, %s17
      %p174 = scmp.lt.s32.totalorder %s17, 3
      %p175 = pnand %p173, %p174
      %p176 = pneg %p175
      // Predicated region
      $region25: #{tpu_custom_call.1} parent=5 // pred_check
        _
      $region26: #{tpu_custom_call.1} parent=5 // pred_check_branch
        %178 = sbr.rel (%p175) target = $region28
      $region27: #{tpu_custom_call.1} parent=5 // pred_region
        %s179 = ssub.s32 %s17, 1
        %s180 = sand.u32 %s49, 1
        %s181 = scalar_lea.sflag [#allocation3], %s180
        %s182 = sand.u32 %s49, 1
        %s183 = smul.addr %s182, 8
        %s184 = scalar_lea.vmem [#allocation2], %s183
        // Predicated region
        $region29: #{tpu_custom_call.1} parent=27 // pred_check
          %p185 = pneg %p62
        $region30: #{tpu_custom_call.1} parent=27 // pred_check_branch
          %187 = sbr.rel (%p185) target = $region32
        $region31: #{tpu_custom_call.1} parent=27 // pred_region
          %188 = dma.done %s181, 128
        $region32: #{tpu_custom_call.1} parent=27 // pred_fallthru
          _
        %s189 = sand.u32 %s75, 1
        %s190 = scalar_lea.sflag [#allocation6], %s189
        %s191 = sand.u32 %s75, 1
        %s192 = smul.addr %s191, 8
        %s193 = scalar_lea.vmem [#allocation5], %s192
        // Predicated region
        $region33: #{tpu_custom_call.1} parent=27 // pred_check
          %p194 = pneg %p88
        $region34: #{tpu_custom_call.1} parent=27 // pred_check_branch
          %196 = sbr.rel (%p194) target = $region36
        $region35: #{tpu_custom_call.1} parent=27 // pred_region
          %197 = dma.done %s190, 128
        $region36: #{tpu_custom_call.1} parent=27 // pred_fallthru
          _
        %s198 = sand.u32 %s49, 1
        %s199 = scalar_lea.sflag [#allocation3], %s198
        %s200 = sand.u32 %s49, 1
        %s201 = smul.addr %s200, 8
        %s202 = scalar_lea.vmem [#allocation2], %s201
        %p203 = pneg %p62
        %p204 = pneg %p59
        %s205 = sand.u32 %s75, 1
        %s206 = scalar_lea.sflag [#allocation6], %s205
        %s207 = sand.u32 %s75, 1
        %s208 = smul.addr %s207, 8
        %s209 = scalar_lea.vmem [#allocation5], %s208
        %p210 = pneg %p88
        %p211 = pneg %p85
        %p212 = pneg %p118
        %p213 = pneg %p115
        %s214 = sand.u32 %s105, 1
        %s215 = scalar_lea.sflag [#allocation4], %s214
        %s216 = sand.u32 %s105, 1
        %s217 = smul.addr %s216, 128
        %s218 = scalar_lea.vmem [#allocation7], %s217
        %s219 = smul.u32 16, %s28
        %s220 = smul.u32 %s28, 128
        %s221 = smul.u32 %s29, 128
        %s222 = sshra.s32 %s220, 7
        %s223 = sand.u32 %s220, 127
        %s224 = scalar_lea.vmem %s184, %s222 [#allocation2]
        %v225 = vld [vmem:[%s224] sm:$0xff]
        %s226 = sshra.s32 %s221, 7
        %s227 = sand.u32 %s221, 127
        %s228 = scalar_lea.vmem %s193, %s226 [#allocation5]
        %v229 = vld [vmem:[%s228] sm:$0xff]
        %230 = vxpose.xlu0.b32.start [1/16] %v225, 128
        %231 = vxpose.xlu0.b32.cont [2/16] 0.0, 128
        %232 = vxpose.xlu0.b32.cont [3/16] 0.0, 128
        %233 = vxpose.xlu0.b32.cont [4/16] 0.0, 128
        %234 = vxpose.xlu0.b32.cont [5/16] 0.0, 128
        %235 = vxpose.xlu0.b32.cont [6/16] 0.0, 128
        %236 = vxpose.xlu0.b32.cont [7/16] 0.0, 128
        %237 = vxpose.xlu0.b32.cont [8/16] 0.0, 128
        %238 = vxpose.xlu0.b32.cont [9/16] 0.0, 128
        %239 = vxpose.xlu0.b32.cont [10/16] 0.0, 128
        %240 = vxpose.xlu0.b32.cont [11/16] 0.0, 128
        %241 = vxpose.xlu0.b32.cont [12/16] 0.0, 128
        %242 = vxpose.xlu0.b32.cont [13/16] 0.0, 128
        %243 = vxpose.xlu0.b32.cont [14/16] 0.0, 128
        %244 = vxpose.xlu0.b32.cont [15/16] 0.0, 128
        %245 = vxpose.xlu0.b32.end [16/16] 0.0, 128
        %v246 = vpop.trf.xlu0
        %v247 = vpop.trf.xlu0
        %v248 = vpop.trf.xlu0
        %v249 = vpop.trf.xlu0
        %v250 = vpop.trf.xlu0
        %v251 = vpop.trf.xlu0
        %v252 = vpop.trf.xlu0
        %v253 = vpop.trf.xlu0
        %v254 = vpop.trf.xlu0
        %v255 = vpop.trf.xlu0
        %v256 = vpop.trf.xlu0
        %v257 = vpop.trf.xlu0
        %v258 = vpop.trf.xlu0
        %v259 = vpop.trf.xlu0
        %v260 = vpop.trf.xlu0
        %v261 = vpop.trf.xlu0
        %vm262 = vcmask 64512
        %v264 = vsel %vm262, %v246, 0
        %v267 = vsel %vm262, %v247, 0
        %v270 = vsel %vm262, %v248, 0
        %v273 = vsel %vm262, %v249, 0
        %v276 = vsel %vm262, %v250, 0
        %v279 = vsel %vm262, %v251, 0
        %v282 = vsel %vm262, %v252, 0
        %v285 = vsel %vm262, %v253, 0
        %v288 = vsel %vm262, %v254, 0
        %v291 = vsel %vm262, %v255, 0
        %v294 = vsel %vm262, %v256, 0
        %v297 = vsel %vm262, %v257, 0
        %v300 = vsel %vm262, %v258, 0
        %v303 = vsel %vm262, %v259, 0
        %v306 = vsel %vm262, %v260, 0
        %v309 = vsel %vm262, %v261, 0
        %311 = vmatprep.subr.mxu0 0.0
        %312 = vmatpush1.msra.mxu0 %v229
        %313 = vmatprep.subr.mxu0 0.0
        %314 = vmatpush1.msra.mxu0 0.0
        %315 = vmatprep.subr.mxu0 0.0
        %316 = vmatpush1.msra.mxu0 0.0
        %317 = vmatprep.subr.mxu0 0.0
        %318 = vmatpush1.msra.mxu0 0.0
        %319 = vmatprep.subr.mxu0 0.0
        %320 = vmatpush1.msra.mxu0 0.0
        %321 = vmatprep.subr.mxu0 0.0
        %322 = vmatpush1.msra.mxu0 0.0
        %323 = vmatprep.subr.mxu0 0.0
        %324 = vmatpush1.msra.mxu0 0.0
        %325 = vmatprep.subr.mxu0 0.0
        %326 = vmatpush1.msra.mxu0 0.0
        %327 = vmatprep.subr.mxu0 0.0
        %328 = vmatpush1.msra.mxu0 0.0
        %329 = vmatprep.subr.mxu0 0.0
        %330 = vmatpush1.msra.mxu0 0.0
        %331 = vmatprep.subr.mxu0 0.0
        %332 = vmatpush1.msra.mxu0 0.0
        %333 = vmatprep.subr.mxu0 0.0
        %334 = vmatpush1.msra.mxu0 0.0
        %335 = vmatprep.subr.mxu0 0.0
        %336 = vmatpush1.msra.mxu0 0.0
        %337 = vmatprep.subr.mxu0 0.0
        %338 = vmatpush1.msra.mxu0 0.0
        %339 = vmatprep.subr.mxu0 0.0
        %340 = vmatpush1.msra.mxu0 0.0
        %341 = vmatprep.subr.mxu0 0.0
        %342 = vmatpush1.msra.mxu0 0.0
        %343 = vmatprep.subr.mxu0 0.0
        %344 = vmatpush1.msra.mxu0 0.0
        %345 = vmatprep.subr.mxu0 0.0
        %346 = vmatpush1.msra.mxu0 0.0
        %347 = vmatprep.subr.mxu0 0.0
        %348 = vmatpush1.msra.mxu0 0.0
        %349 = vmatprep.subr.mxu0 0.0
        %350 = vmatpush1.msra.mxu0 0.0
        %351 = vmatprep.subr.mxu0 0.0
        %352 = vmatpush1.msra.mxu0 0.0
        %353 = vmatprep.subr.mxu0 0.0
        %354 = vmatpush1.msra.mxu0 0.0
        %355 = vmatprep.subr.mxu0 0.0
        %356 = vmatpush1.msra.mxu0 0.0
        %357 = vmatprep.subr.mxu0 0.0
        %358 = vmatpush1.msra.mxu0 0.0
        %359 = vmatprep.subr.mxu0 0.0
        %360 = vmatpush1.msra.mxu0 0.0
        %361 = vmatprep.subr.mxu0 0.0
        %362 = vmatpush1.msra.mxu0 0.0
        %363 = vmatprep.subr.mxu0 0.0
        %364 = vmatpush1.msra.mxu0 0.0
        %365 = vmatprep.subr.mxu0 0.0
        %366 = vmatpush1.msra.mxu0 0.0
        %367 = vmatprep.subr.mxu0 0.0
        %368 = vmatpush1.msra.mxu0 0.0
        %369 = vmatprep.subr.mxu0 0.0
        %370 = vmatpush1.msra.mxu0 0.0
        %371 = vmatprep.subr.mxu0 0.0
        %372 = vmatpush1.msra.mxu0 0.0
        %373 = vmatprep.subr.mxu0 0.0
        %374 = vmatpush1.msra.mxu0 0.0
        %375 = vmatprep.mubr.f32.mxu0 0.0
        %376 = vmatmul.mubr.f32.gmra.mrb[0].mxu0 %v264
        %v377 = vpop.f32.mrb[0].mxu0
        %v378 = vadd.f32 0.0, %v377
        %v379 = vpop.f32.mrb[0].mxu0
        %380 = vmatprep.mubr.f32.mxu0 0.0
        %381 = vmatmul.mubr.f32.gmra.mrb[0].mxu0 %v267
        %v382 = vpop.f32.mrb[0].mxu0
        %v383 = vadd.f32 0.0, %v382
        %v384 = vpop.f32.mrb[0].mxu0
        %385 = vmatprep.mubr.f32.mxu0 0.0
        %386 = vmatmul.mubr.f32.gmra.mrb[0].mxu0 %v270
        %v387 = vpop.f32.mrb[0].mxu0
        %v388 = vadd.f32 0.0, %v387
        %v389 = vpop.f32.mrb[0].mxu0
        %390 = vmatprep.mubr.f32.mxu0 0.0
        %391 = vmatmul.mubr.f32.gmra.mrb[0].mxu0 %v273
        %v392 = vpop.f32.mrb[0].mxu0
        %v393 = vadd.f32 0.0, %v392
        %v394 = vpop.f32.mrb[0].mxu0
        %395 = vmatprep.mubr.f32.mxu0 0.0
        %396 = vmatmul.mubr.f32.gmra.mrb[0].mxu0 %v276
        %v397 = vpop.f32.mrb[0].mxu0
        %v398 = vadd.f32 0.0, %v397
        %v399 = vpop.f32.mrb[0].mxu0
        %400 = vmatprep.mubr.f32.mxu0 0.0
        %401 = vmatmul.mubr.f32.gmra.mrb[0].mxu0 %v279
        %v402 = vpop.f32.mrb[0].mxu0
        %v403 = vadd.f32 0.0, %v402
        %v404 = vpop.f32.mrb[0].mxu0
        %405 = vmatprep.mubr.f32.mxu0 0.0
        %406 = vmatmul.mubr.f32.gmra.mrb[0].mxu0 %v282
        %v407 = vpop.f32.mrb[0].mxu0
        %v408 = vadd.f32 0.0, %v407
        %v409 = vpop.f32.mrb[0].mxu0
        %410 = vmatprep.mubr.f32.mxu0 0.0
        %411 = vmatmul.mubr.f32.gmra.mrb[0].mxu0 %v285
        %v412 = vpop.f32.mrb[0].mxu0
        %v413 = vadd.f32 0.0, %v412
        %v414 = vpop.f32.mrb[0].mxu0
        %415 = vmatprep.mubr.f32.mxu0 0.0
        %416 = vmatmul.mubr.f32.gmra.mrb[0].mxu0 %v288
        %v417 = vpop.f32.mrb[0].mxu0
        %v418 = vadd.f32 0.0, %v417
        %v419 = vpop.f32.mrb[0].mxu0
        %420 = vmatprep.mubr.f32.mxu0 0.0
        %421 = vmatmul.mubr.f32.gmra.mrb[0].mxu0 %v291
        %v422 = vpop.f32.mrb[0].mxu0
        %v423 = vadd.f32 0.0, %v422
        %v424 = vpop.f32.mrb[0].mxu0
        %425 = vmatprep.mubr.f32.mxu0 0.0
        %426 = vmatmul.mubr.f32.gmra.mrb[0].mxu0 %v294
        %v427 = vpop.f32.mrb[0].mxu0
        %v428 = vadd.f32 0.0, %v427
        %v429 = vpop.f32.mrb[0].mxu0
        %430 = vmatprep.mubr.f32.mxu0 0.0
        %431 = vmatmul.mubr.f32.gmra.mrb[0].mxu0 %v297
        %v432 = vpop.f32.mrb[0].mxu0
        %v433 = vadd.f32 0.0, %v432
        %v434 = vpop.f32.mrb[0].mxu0
        %435 = vmatprep.mubr.f32.mxu0 0.0
        %436 = vmatmul.mubr.f32.gmra.mrb[0].mxu0 %v300
        %v437 = vpop.f32.mrb[0].mxu0
        %v438 = vadd.f32 0.0, %v437
        %v439 = vpop.f32.mrb[0].mxu0
        %440 = vmatprep.mubr.f32.mxu0 0.0
        %441 = vmatmul.mubr.f32.gmra.mrb[0].mxu0 %v303
        %v442 = vpop.f32.mrb[0].mxu0
        %v443 = vadd.f32 0.0, %v442
        %v444 = vpop.f32.mrb[0].mxu0
        %445 = vmatprep.mubr.f32.mxu0 0.0
        %446 = vmatmul.mubr.f32.gmra.mrb[0].mxu0 %v306
        %v447 = vpop.f32.mrb[0].mxu0
        %v448 = vadd.f32 0.0, %v447
        %v449 = vpop.f32.mrb[0].mxu0
        %450 = vmatprep.mubr.f32.mxu0 0.0
        %451 = vmatmul.mubr.f32.gmra.mrb[0].mxu0 %v309
        %v452 = vpop.f32.mrb[0].mxu0
        %v453 = vadd.f32 0.0, %v452
        %v454 = vpop.f32.mrb[0].mxu0
        %455 = vdwg.mxu0
        %v456 = vmax.f32 %v378, 0.0
        %v457 = vmax.f32 %v383, 0.0
        %v458 = vmax.f32 %v388, 0.0
        %v459 = vmax.f32 %v393, 0.0
        %v460 = vmax.f32 %v398, 0.0
        %v461 = vmax.f32 %v403, 0.0
        %v462 = vmax.f32 %v408, 0.0
        %v463 = vmax.f32 %v413, 0.0
        %v464 = vmax.f32 %v418, 0.0
        %v465 = vmax.f32 %v423, 0.0
        %v466 = vmax.f32 %v428, 0.0
        %v467 = vmax.f32 %v433, 0.0
        %v468 = vmax.f32 %v438, 0.0
        %v469 = vmax.f32 %v443, 0.0
        %v470 = vmax.f32 %v448, 0.0
        %v471 = vmax.f32 %v453, 0.0
        %472 = vst [vmem:[%s218] sm:$0xff] %v456
        %473 = vst [vmem:[%s218 + $0x8] sm:$0xff] %v457
        %474 = vst [vmem:[%s218 + $0x10] sm:$0xff] %v458
        %475 = vst [vmem:[%s218 + $0x18] sm:$0xff] %v459
        %476 = vst [vmem:[%s218 + $0x20] sm:$0xff] %v460
        %477 = vst [vmem:[%s218 + $0x28] sm:$0xff] %v461
        %478 = vst [vmem:[%s218 + $0x30] sm:$0xff] %v462
        %479 = vst [vmem:[%s218 + $0x38] sm:$0xff] %v463
        %480 = vst [vmem:[%s218 + $0x40] sm:$0xff] %v464
        %481 = vst [vmem:[%s218 + $0x48] sm:$0xff] %v465
        %482 = vst [vmem:[%s218 + $0x50] sm:$0xff] %v466
        %483 = vst [vmem:[%s218 + $0x58] sm:$0xff] %v467
        %484 = vst [vmem:[%s218 + $0x60] sm:$0xff] %v468
        %485 = vst [vmem:[%s218 + $0x68] sm:$0xff] %v469
        %486 = vst [vmem:[%s218 + $0x70] sm:$0xff] %v470
        %487 = vst [vmem:[%s218 + $0x78] sm:$0xff] %v471
        %s488 = sand.u32 %s105, 1
        %s489 = scalar_lea.sflag [#allocation4], %s488
        %s490 = sand.u32 %s105, 1
        %s491 = smul.addr %s490, 128
        %s492 = scalar_lea.vmem [#allocation7], %s491
        // Predicated region
        $region37: #{tpu_custom_call.1} parent=27 // pred_check
          %p493 = pneg %p115
        $region38: #{tpu_custom_call.1} parent=27 // pred_check_branch
          %495 = sbr.rel (%p493) target = $region40
        $region39: #{tpu_custom_call.1} parent=27 // pred_region
          %s496 = smul.u32 16, %s28
          %s498 = ssub.s32 2048, 2048
          %499 = vsyncadd %s489, %s498
          %s500 = sadd.s32 %s29, %s496
          %s501 = smul.addr %s27, 16
          %s502 = sadd.s32 %s500, %s501
          %s503 = smul.addr %s502, 128
          %s504 = scalar_lea.hbm %s2, %s503
          %s505 = sshll.u32 %s492, 4
          %s506 = int_to_ptr.vmem [resolvable:$true] %s505
          %511 = dma.vmem_to_hbm [thread:$0]  %s506, 2048, %s504, %s489, 128, 128, 8
        $region40: #{tpu_custom_call.1} parent=27 // pred_fallthru
          _
      $region28: #{tpu_custom_call.1} parent=5 // pred_fallthru
        _
      %p512 = scmp.le.s32.totalorder 2, %s17
      // Predicated region
      $region41: #{tpu_custom_call.1} parent=5 // pred_check
        %p513 = pneg %p512
      $region42: #{tpu_custom_call.1} parent=5 // pred_check_branch
        %515 = sbr.rel (%p513) target = $region44
      $region43: #{tpu_custom_call.1} parent=5 // pred_region
        %s516 = ssub.s32 %s17, 2
        // Predicated region
        $region45: #{tpu_custom_call.1} parent=43 // pred_check
          %p517 = pneg %p121
        $region46: #{tpu_custom_call.1} parent=43 // pred_check_branch
          %519 = sbr.rel (%p517) target = $region48
        $region47: #{tpu_custom_call.1} parent=43 // pred_region
          %s520 = sand.u32 %s106, 1
          %s521 = scalar_lea.sflag [#allocation4], %s520
          %s522 = sand.u32 %s106, 1
          %s523 = smul.addr %s522, 128
          %s524 = scalar_lea.vmem [#allocation7], %s523
          %525 = dma.done %s521, 2048
        $region48: #{tpu_custom_call.1} parent=43 // pred_fallthru
          _
      $region44: #{tpu_custom_call.1} parent=5 // pred_fallthru
        _
    $region6: #{tpu_custom_call.1} parent=1 // loop_footer
      %s21 = sadd.s32 1, %s17
    $region7: #{tpu_custom_call.1} parent=1 // loop_footer_branch
      %16 = sbr.rel target = $region3
    $region8: #{tpu_custom_call.1} parent=1 // loop_exit
      _
    %526 = vsyncpa [#allocation3], 1
    %s527 = scalar_lea.sflag [#allocation3], 1
    %528 = vsyncpa %s527, 1
    %529 = vsyncpa [#allocation6], 1
    %s530 = scalar_lea.sflag [#allocation6], 1
    %531 = vsyncpa %s530, 1
    %532 = vsyncpa [#allocation4], 1
    %s533 = scalar_lea.sflag [#allocation4], 1
    %534 = vsyncpa %s533, 1

</llo_original>
